<compile_context>
chip_gen: v7x
topology: tpu7x:2x2x1
jax: 0.10.0
libtpu: 0.0.40
codegen_flags: <defaults>
</compile_context>

<pallas_src>
import inspect

import jax
import jax.numpy as jnp
from jax.experimental import pallas as pl
from jax.experimental.pallas import tpu as pltpu

COMPUTE_DTYPE = jnp.bfloat16   # TPU analogue of torch.float16 compute dtype
LANE = 128                     # lane width / MXU-friendly alignment
ROW_ALIGN = 16                 # bf16 sublane packing (also satisfies fp32's 8)
VMEM_HEADROOM = 8 << 20        # leave room for Mosaic internal scratch


def _round_up(x, m):
    return ((x + m - 1) // m) * m


try:
    _HAS_PIPELINE_MODE = hasattr(pl, "Buffered") and (
        "pipeline_mode" in inspect.signature(pl.BlockSpec).parameters)
except Exception:  # pragma: no cover
    _HAS_PIPELINE_MODE = False


def _spec(shape, index_map, buffers=None):
    """BlockSpec with optional explicit buffer count (falls back to default)."""
    if buffers is not None and _HAS_PIPELINE_MODE:
        return pl.BlockSpec(shape, index_map, pipeline_mode=pl.Buffered(buffers))
    return pl.BlockSpec(shape, index_map)


def _vmem_capacity_bytes():
    try:
        return int(pltpu.get_tpu_info().vmem_capacity_bytes)
    except Exception:
        return 64 << 20   # conservative: v7x per-TensorCore VMEM


# --------------------------------------------------------------------------- #
# Kernels
# --------------------------------------------------------------------------- #

def _svd_kernel_resident(x_ref, vt_ref, ut_ref, o_ref):
    # x_ref : (tm, in_size)      input row tile (any float dtype; cast here)
    # vt_ref: (in_size, r_pad)   resident svd_v.T (rank zero-padded to 128x)
    # ut_ref: (r_pad, out_size)  resident svd_u.T
    # o_ref : (tm, out_size)
    x = x_ref[...].astype(vt_ref.dtype)
    h = jnp.dot(x, vt_ref[...], preferred_element_type=jnp.float32)
    h = h.astype(ut_ref.dtype)   # mirror the fp16 intermediate of the reference
    y = jnp.dot(h, ut_ref[...], preferred_element_type=jnp.float32)
    o_ref[...] = y.astype(o_ref.dtype)


def _svd_kernel_ntiled(x_ref, vt_ref, ut_ref, o_ref, h_ref):
    # grid = (grid_m, grid_n).  h is computed once per row tile (j == 0) into a
    # VMEM scratch and reused for every N tile, so Ut streams instead of residing.
    @pl.when(pl.program_id(1) == 0)
    def _():
        x = x_ref[...].astype(vt_ref.dtype)
        h = jnp.dot(x, vt_ref[...], preferred_element_type=jnp.float32)
        h_ref[...] = h.astype(h_ref.dtype)

    y = jnp.dot(h_ref[...], ut_ref[...], preferred_element_type=jnp.float32)
    o_ref[...] = y.astype(o_ref.dtype)


# --------------------------------------------------------------------------- #
# Wrappers
# --------------------------------------------------------------------------- #

def prepare_svd_weights(svd_v, svd_u):
    """Transpose + rank-pad weights once (hoisted out of the per-call hot path).

    svd_v: (low_rank, in_size)  -> vt_p: (in_size, r_pad)
    svd_u: (out_size, low_rank) -> ut_p: (r_pad, out_size)
    Zero-padding the shared rank axis to a lane multiple is numerically exact.
    For low_rank << 128 most of that padding is wasted MXU work (irreducible);
    the realizable wins for tiny ranks are all on the data-movement side.
    """
    low_rank, _ = svd_v.shape
    out_size, low_rank_u = svd_u.shape
    assert low_rank == low_rank_u
    r_pad = max(_round_up(low_rank, LANE), LANE)

    vt = jnp.transpose(svd_v).astype(COMPUTE_DTYPE)   # (in_size, low_rank)
    ut = jnp.transpose(svd_u).astype(COMPUTE_DTYPE)   # (low_rank, out_size)
    vt_p = jnp.pad(vt, ((0, 0), (0, r_pad - low_rank)))
    ut_p = jnp.pad(ut, ((0, r_pad - low_rank), (0, 0)))
    return vt_p, ut_p, out_size


def svd_linear_forward(x, vt_p, ut_p, *, force_tn=None):
    """SVDLinearV1.forward: y = (x @ svd_v.T) @ svd_u.T.

    x: (..., in_size) float array (fp32 or bf16 — cast happens in-kernel).
    vt_p/ut_p: from prepare_svd_weights.
    force_tn: force the N-tiled (streaming Ut) path with this N tile size.
    """
    orig_shape = x.shape
    in_size = orig_shape[-1]
    assert vt_p.shape[0] == in_size
    r_pad = vt_p.shape[1]
    out_size = ut_p.shape[1]

    x2d = x.reshape(-1, in_size)          # no dtype cast, no M padding
    m = x2d.shape[0]
    x_bytes = jnp.dtype(x2d.dtype).itemsize

    vmem_cap = _vmem_capacity_bytes()
    budget = max(vmem_cap - VMEM_HEADROOM, 16 << 20)
    w_bufs = 1 if _HAS_PIPELINE_MODE else 2     # weight buffers actually allocated

    # Row tile: budget-driven cap per generation (1024 on 128 MiB v5e/v6e,
    # 512 on v7x's 64 MiB), multiple of 16, and split into >= 2 tiles when
    # m allows so the "parallel" M axis feeds both v7x TensorCores.
    tm_cap = 1024 if vmem_cap >= (100 << 20) else 512
    if m <= ROW_ALIGN:
        tm = m
    else:
        tm = min(tm_cap, _round_up(pl.cdiv(m, 2), ROW_ALIGN))

    vt_bytes = in_size * r_pad * 2 * w_bufs
    ut_res_bytes = r_pad * out_size * 2 * w_bufs

    def resident_bytes(tm_, x_bufs_):
        tile = (tm_ * in_size * x_bytes * x_bufs_      # pipelined input tiles
                + tm_ * out_size * 2 * 2               # pipelined output tiles
                + tm_ * r_pad * 4 + tm_ * out_size * 4)  # fp32 temporaries
        return vt_bytes + ut_res_bytes + tile

    use_ntiled = force_tn is not None
    if not use_ntiled:
        while tm > ROW_ALIGN and resident_bytes(tm, 2) > budget:
            tm = _round_up(tm // 2, ROW_ALIGN)
        if resident_bytes(tm, 2) > budget:
            use_ntiled = True

    # ---------------- resident-weights path (typical layer sizes) ----------- #
    if not use_ntiled:
        grid_m = pl.cdiv(m, tm)
        x_bufs = 2
        # Deeper x pipeline hides DMA latency spikes on a memory-bound kernel,
        # but only if the VMEM budget allows the extra buffer.
        if _HAS_PIPELINE_MODE and grid_m >= 3 and resident_bytes(tm, 3) <= budget:
            x_bufs = 3
        need = resident_bytes(tm, x_bufs)

        cost = pl.CostEstimate(
            flops=2 * m * r_pad * (in_size + out_size),
            transcendentals=0,
            bytes_accessed=(m * in_size * x_bytes + m * out_size * 2
                            + in_size * r_pad * 2 + r_pad * out_size * 2),
        )
        out = pl.pallas_call(
            _svd_kernel_resident,
            out_shape=jax.ShapeDtypeStruct((m, out_size), COMPUTE_DTYPE),
            grid_spec=pltpu.PrefetchScalarGridSpec(
                num_scalar_prefetch=0,
                grid=(grid_m,),
                in_specs=[
                    _spec((tm, in_size), lambda i: (i, 0),
                          buffers=None if x_bufs == 2 else x_bufs),
                    # Constant block index -> single-buffer the resident weights.
                    _spec((in_size, r_pad), lambda i: (0, 0), buffers=1),
                    _spec((r_pad, out_size), lambda i: (0, 0), buffers=1),
                ],
                out_specs=pl.BlockSpec((tm, out_size), lambda i: (i, 0)),
            ),
            compiler_params=pltpu.CompilerParams(
                dimension_semantics=("parallel",),
                vmem_limit_bytes=int(min(vmem_cap, max(need + (4 << 20), 32 << 20))),
            ),
            cost_estimate=cost,
        )(x2d, vt_p, ut_p)
        return out.reshape(*orig_shape[:-1], out_size)

    # ---------------- N-tiled path (large out_size: stream Ut) -------------- #
    if force_tn is not None:
        tn = force_tn
    else:
        # 256-wide (or larger) output tiles keep the 2x256 MXU and store path
        # full on v6e/v7x; out_size below that uses the full dim.
        tn = 512 if out_size >= 512 else (256 if out_size >= 256 else out_size)
    tn = min(tn, out_size)

    def ntiled_bytes(tm_):
        return (vt_bytes
                + r_pad * tn * 2 * 2                 # pipelined Ut tiles
                + tm_ * in_size * x_bytes * 2        # pipelined x tiles
                + tm_ * tn * 2 * 2                   # pipelined output tiles
                + tm_ * r_pad * 2                    # bf16 h scratch
                + tm_ * r_pad * 4 + tm_ * tn * 4)    # fp32 temporaries

    while tm > ROW_ALIGN and ntiled_bytes(tm) > budget:
        tm = _round_up(tm // 2, ROW_ALIGN)
    # TODO(synk): for in_size so large that Vt + one row tile still exceeds VMEM,
    # add a K-tiled contraction axis with an fp32 accumulator + pl.when finalize.

    grid_m = pl.cdiv(m, tm)
    grid_n = pl.cdiv(out_size, tn)
    need = ntiled_bytes(tm)

    cost = pl.CostEstimate(
        flops=2 * m * r_pad * (in_size + out_size),
        transcendentals=0,
        bytes_accessed=(m * in_size * x_bytes + m * out_size * 2
                        + in_size * r_pad * 2 + grid_m * r_pad * out_size * 2),
    )
    out = pl.pallas_call(
        _svd_kernel_ntiled,
        out_shape=jax.ShapeDtypeStruct((m, out_size), COMPUTE_DTYPE),
        grid_spec=pltpu.PrefetchScalarGridSpec(
            num_scalar_prefetch=0,
            grid=(grid_m, grid_n),
            in_specs=[
                pl.BlockSpec((tm, in_size), lambda i, j: (i, 0)),
                _spec((in_size, r_pad), lambda i, j: (0, 0), buffers=1),
                pl.BlockSpec((r_pad, tn), lambda i, j: (0, j)),
            ],
            out_specs=pl.BlockSpec((tm, tn), lambda i, j: (i, j)),
            scratch_shapes=[pltpu.VMEM((tm, r_pad), COMPUTE_DTYPE)],
        ),
        # N axis must stay "arbitrary": the h scratch written at j == 0 is
        # carried across the whole j range of a row tile (M axis is parallel).
        compiler_params=pltpu.CompilerParams(
            dimension_semantics=("parallel", "arbitrary"),
            vmem_limit_bytes=int(min(vmem_cap, max(need + (4 << 20), 32 << 20))),
        ),
        cost_estimate=cost,
    )(x2d, vt_p, ut_p)
    return out.reshape(*orig_shape[:-1], out_size)


def make_svd_params(key, in_size, out_size, ratio):
    """Deterministic synthetic parameters with the shapes __init__ produces.

    low_rank = int(in_size * out_size * ratio / (in_size + out_size))
    svd_u: (out_size, low_rank)   (svd_u_proj.weight)
    svd_v: (low_rank, in_size)    (svd_v_proj.weight)
    """
    # TODO(synk): the SVD-based initialization (torch.linalg.svd / inv of the
    # scaling matrix) is host-side preprocessing, not part of the forward hot
    # path; parameters are synthesized directly at the correct shapes instead.
    low_rank = int(in_size * out_size * ratio / (in_size + out_size))
    k_u, k_v = jax.random.split(key)
    svd_u = (jax.random.normal(k_u, (out_size, low_rank), jnp.float32) * 0.05).astype(COMPUTE_DTYPE)
    svd_v = (jax.random.normal(k_v, (low_rank, in_size), jnp.float32) * 0.05).astype(COMPUTE_DTYPE)
    return svd_u, svd_v, low_rank


def _reference(x, svd_v, svd_u):
    h = jnp.dot(x.astype(COMPUTE_DTYPE), svd_v.T.astype(COMPUTE_DTYPE),
                preferred_element_type=jnp.float32).astype(COMPUTE_DTYPE)
    return jnp.dot(h, svd_u.T.astype(COMPUTE_DTYPE),
                   preferred_element_type=jnp.float32).astype(COMPUTE_DTYPE)


if __name__ == "__main__":
    key = jax.random.PRNGKey(0)
    k_x, k_w, k_x2, k_w2 = jax.random.split(key, 4)

    # ---- test 1: resident-weights path (small demo shapes) ------------------
    batch, seq, in_size, out_size, ratio = 2, 8, 32, 32, 0.5
    svd_u, svd_v, low_rank = make_svd_params(k_w, in_size, out_size, ratio)
    x = jax.random.normal(k_x, (batch, seq, in_size), jnp.float32)

    vt_p, ut_p, out_sz = prepare_svd_weights(svd_v, svd_u)  # once, off hot path
    y = jax.block_until_ready(svd_linear_forward(x, vt_p, ut_p))

    y_ref = _reference(x, svd_v, svd_u)
    assert y.shape == (batch, seq, out_size), y.shape
    assert jnp.allclose(y.astype(jnp.float32), y_ref.astype(jnp.float32),
                        atol=2e-2, rtol=2e-2)

    # ---- test 2: N-tiled (streaming Ut) path, exercised at small scale ------
    b2, s2, in2, out2, ratio2 = 2, 16, 64, 256, 0.5
    svd_u2, svd_v2, _ = make_svd_params(k_w2, in2, out2, ratio2)
    x2 = jax.random.normal(k_x2, (b2, s2, in2), jnp.float32)
    vt2, ut2, _ = prepare_svd_weights(svd_v2, svd_u2)

    y2 = jax.block_until_ready(svd_linear_forward(x2, vt2, ut2, force_tn=128))
    y2_ref = _reference(x2, svd_v2, svd_u2)
    assert y2.shape == (b2, s2, out2), y2.shape
    assert jnp.allclose(y2.astype(jnp.float32), y2_ref.astype(jnp.float32),
                        atol=2e-2, rtol=2e-2)

    print("KERNEL_OK")
</pallas_src>

<mosaic_0001>
module attributes {stable_mosaic.version = 11 : i64} {
  func.func @_svd_kernel_resident(%arg0: i32, %arg1: memref<16x32xf32, #tpu.memory_space<vmem>>, %arg2: memref<32x128xbf16, #tpu.memory_space<vmem>>, %arg3: memref<128x32xbf16, #tpu.memory_space<vmem>>, %arg4: memref<16x32xbf16, #tpu.memory_space<vmem>>) attributes {dimension_semantics = [#tpu.dimension_semantics<parallel>], iteration_bounds = array<i64: 1>, scalar_prefetch = 0 : i64, scratch_operands = 0 : i64, tpu.core_type = #tpu.core_type<tc>, window_params = [{transform_indices = @transform_0, window_bounds = array<i64: 16, 32>}, {pipeline_mode = #tpu.pipeline_mode<synchronous>, transform_indices = @transform_1, window_bounds = array<i64: 32, 128>}, {pipeline_mode = #tpu.pipeline_mode<synchronous>, transform_indices = @transform_2, window_bounds = array<i64: 128, 32>}, {transform_indices = @transform_3, window_bounds = array<i64: 16, 32>}]} {
    %c0 = arith.constant 0 : index
    %c0_0 = arith.constant 0 : index
    %0 = vector.load %arg1[%c0, %c0_0] : memref<16x32xf32, #tpu.memory_space<vmem>>, vector<16x32xf32>
    %1 = arith.truncf %0 : vector<16x32xf32> to vector<16x32xbf16>
    %c0_1 = arith.constant 0 : index
    %c0_2 = arith.constant 0 : index
    %2 = vector.load %arg2[%c0_1, %c0_2] : memref<32x128xbf16, #tpu.memory_space<vmem>>, vector<32x128xbf16>
    %cst = arith.constant dense<0.000000e+00> : vector<16x128xf32>
    %3 = tpu.matmul %1, %2, %cst {dimension_numbers = #tpu.dot_dimension_numbers<[1], [0], [0], [1], [0, 0, 1, 1], [], []>} : vector<16x32xbf16>, vector<32x128xbf16>, vector<16x128xf32> -> vector<16x128xf32>
    %4 = arith.truncf %3 : vector<16x128xf32> to vector<16x128xbf16>
    %c0_3 = arith.constant 0 : index
    %c0_4 = arith.constant 0 : index
    %5 = vector.load %arg3[%c0_3, %c0_4] : memref<128x32xbf16, #tpu.memory_space<vmem>>, vector<128x32xbf16>
    %cst_5 = arith.constant dense<0.000000e+00> : vector<16x32xf32>
    %6 = tpu.matmul %4, %5, %cst_5 {dimension_numbers = #tpu.dot_dimension_numbers<[1], [0], [0], [1], [0, 0, 1, 1], [], []>} : vector<16x128xbf16>, vector<128x32xbf16>, vector<16x32xf32> -> vector<16x32xf32>
    %7 = arith.truncf %6 : vector<16x32xf32> to vector<16x32xbf16>
    %c0_6 = arith.constant 0 : index
    %c0_7 = arith.constant 0 : index
    %8 = vector.load %arg4[%c0_6, %c0_7] : memref<16x32xbf16, #tpu.memory_space<vmem>>, vector<16x32xbf16>
    tpu.vector_store %arg4[%c0_6, %c0_7], %7 {strides = array<i32>} : memref<16x32xbf16, #tpu.memory_space<vmem>>, vector<16x32xbf16>,
    return
  }
  func.func @transform_0(%arg0: i32) -> (i32, i32) {
    %c0_i32 = arith.constant 0 : i32
    %c0_i32_0 = arith.constant 0 : i32
    return %arg0, %c0_i32 : i32, i32
  }
  func.func @transform_1(%arg0: i32) -> (i32, i32) {
    %c0_i32 = arith.constant 0 : i32
    %c0_i32_0 = arith.constant 0 : i32
    %c0_i32_1 = arith.constant 0 : i32
    return %c0_i32, %c0_i32_0 : i32, i32
  }
  func.func @transform_2(%arg0: i32) -> (i32, i32) {
    %c0_i32 = arith.constant 0 : i32
    %c0_i32_0 = arith.constant 0 : i32
    %c0_i32_1 = arith.constant 0 : i32
    return %c0_i32, %c0_i32_0 : i32, i32
  }
  func.func @transform_3(%arg0: i32) -> (i32, i32) {
    %c0_i32 = arith.constant 0 : i32
    %c0_i32_0 = arith.constant 0 : i32
    return %arg0, %c0_i32 : i32, i32
  }
}

</mosaic_0001>

<llo_original>
// kernel: tpu_custom_call.1
$region0: #{tpu_custom_call.1}
  #allocation0 [shape = 'u32[]', space=smem, size = 0x4, offset = 0x4, fixed_abs, tag = 'smem constant byte address 0x4 - core index']
  #allocation1 [shape = 'u32[144,128]{1,0:T(1,128)}', space=vmem, size = 0x12000, scoped, tag = 'internal scratch']
  %s0 = inlined_call_operand.vmem [shape: f32[16,32], index: 0, kind: input, shape index: {}]
  %s1 = inlined_call_operand.vmem [shape: bf16[32,128], index: 1, kind: input, shape index: {}]
  %s2 = inlined_call_operand.vmem [shape: bf16[128,32], index: 2, kind: input, shape index: {}]
  %s3 = inlined_call_operand.hbm [shape: bf16[16,32], index: 3, kind: output, shape index: {}]
  %s4 = sld [smem:[#allocation0]]
  $region22: #{tpu_custom_call.1} parent=0
    _
  %s6 = ssub.s32 1, %s4
  %s7 = scalar_select 0, %s6, %s4
  $region1: #{tpu_custom_call.1} parent=0
    #allocation2 [shape = 'u8[4096]{0}', space=vmem, size = 0x1000, scoped, tag = 'output window, operand 0, single buffered']
    #allocation3 [shape = 's32[1]{0}', space=sflag, size = 0x4, scoped, tag = 'scoped memory for tpu_custom_call.1']
    %8 = vsyncpa [#allocation3], 0
    // Predicated region
    $region2: #{tpu_custom_call.1} parent=1 // pred_check
      _
    $region3: #{tpu_custom_call.1} parent=1 // pred_check_branch
      %10 = sbr.rel (0) target = $region5
    $region4: #{tpu_custom_call.1} parent=1 // pred_region
      _
    $region5: #{tpu_custom_call.1} parent=1 // pred_fallthru
      _
    // Predicated region
    $region6: #{tpu_custom_call.1} parent=1 // pred_check
      _
    $region7: #{tpu_custom_call.1} parent=1 // pred_check_branch
      %12 = sbr.rel (0) target = $region9
    $region8: #{tpu_custom_call.1} parent=1 // pred_region
      _
    $region9: #{tpu_custom_call.1} parent=1 // pred_fallthru
      _
    // Predicated region
    $region10: #{tpu_custom_call.1} parent=1 // pred_check
      _
    $region11: #{tpu_custom_call.1} parent=1 // pred_check_branch
      %14 = sbr.rel (0) target = $region13
    $region12: #{tpu_custom_call.1} parent=1 // pred_region
      _
    $region13: #{tpu_custom_call.1} parent=1 // pred_fallthru
      _
    %v16 = vld [vmem:[%s0] sm:$0xff]
    %v17 = vld [vmem:[%s0 + $0x8] sm:$0xff]
    %v18 = vpack.c.bf16 %v17, %v16
    %v19 = vld [vmem:[%s1] sm:$0xf]
    %v20 = vld [vmem:[%s1 + $0x4] sm:$0xf]
    %v21 = vld [vmem:[%s1 + $0x8] sm:$0xf]
    %v22 = vld [vmem:[%s1 + $0xc] sm:$0xf]
    %v27 = vunpack.c.l.b16 %v19
    %v28 = vunpack.c.l.b16 %v20
    %v29 = vunpack.c.l.b16 %v21
    %v30 = vunpack.c.l.b16 %v22
    %v31 = vpack.c.b16 %v28, %v27
    %v32 = vpack.c.b16 %v30, %v29
    %vm35 = vcmask 261120
    %v37 = vsel %vm35, %v18, 0
    %39 = vmatprep.subr.bf16.mxu0 0
    %40 = vmatpush1.bf16.msra.mxu0 %v31
    %41 = vmatprep.subr.bf16.mxu0 0
    %42 = vmatpush1.bf16.msra.mxu0 %v32
    %43 = vmatprep.subr.bf16.mxu0 0
    %44 = vmatpush1.bf16.msra.mxu0 0
    %45 = vmatprep.subr.bf16.mxu0 0
    %46 = vmatpush1.bf16.msra.mxu0 0
    %47 = vmatprep.subr.bf16.mxu0 0
    %48 = vmatpush1.bf16.msra.mxu0 0
    %49 = vmatprep.subr.bf16.mxu0 0
    %50 = vmatpush1.bf16.msra.mxu0 0
    %51 = vmatprep.subr.bf16.mxu0 0
    %52 = vmatpush1.bf16.msra.mxu0 0
    %53 = vmatprep.subr.bf16.mxu0 0
    %54 = vmatpush1.bf16.msra.mxu0 0
    %55 = vmatprep.subr.bf16.mxu0 0
    %56 = vmatpush1.bf16.msra.mxu0 0
    %57 = vmatprep.subr.bf16.mxu0 0
    %58 = vmatpush1.bf16.msra.mxu0 0
    %59 = vmatprep.subr.bf16.mxu0 0
    %60 = vmatpush1.bf16.msra.mxu0 0
    %61 = vmatprep.subr.bf16.mxu0 0
    %62 = vmatpush1.bf16.msra.mxu0 0
    %63 = vmatprep.subr.bf16.mxu0 0
    %64 = vmatpush1.bf16.msra.mxu0 0
    %65 = vmatprep.subr.bf16.mxu0 0
    %66 = vmatpush1.bf16.msra.mxu0 0
    %67 = vmatprep.subr.bf16.mxu0 0
    %68 = vmatpush1.bf16.msra.mxu0 0
    %69 = vmatprep.subr.bf16.mxu0 0
    %70 = vmatpush1.bf16.msra.mxu0 0
    %71 = vmatprep.mubr.bf16.mxu0 0
    %72 = vmatmul.mubr.bf16.gmra.mrb[0].mxu0 %v37
    %v73 = vpop.f32.mrb[0].mxu0
    %v74 = vadd.f32 0.0, %v73
    %v75 = vpop.f32.mrb[0].mxu0
    %v76 = vpop.f32.mrb[0].mxu0
    %v77 = vadd.f32 0.0, %v76
    %v78 = vpop.f32.mrb[0].mxu0
    %79 = vdwg.mxu0
    %v80 = vpack.c.bf16 %v77, %v74
    %v81 = vld [vmem:[%s2] sm:$0xf]
    %v82 = vld [vmem:[%s2 + $0x4] sm:$0xf]
    %v83 = vld [vmem:[%s2 + $0x8] sm:$0xf]
    %v84 = vld [vmem:[%s2 + $0xc] sm:$0xf]
    %v85 = vld [vmem:[%s2 + $0x10] sm:$0xf]
    %v86 = vld [vmem:[%s2 + $0x14] sm:$0xf]
    %v87 = vld [vmem:[%s2 + $0x18] sm:$0xf]
    %v88 = vld [vmem:[%s2 + $0x1c] sm:$0xf]
    %v89 = vld [vmem:[%s2 + $0x20] sm:$0xf]
    %v90 = vld [vmem:[%s2 + $0x24] sm:$0xf]
    %v91 = vld [vmem:[%s2 + $0x28] sm:$0xf]
    %v92 = vld [vmem:[%s2 + $0x2c] sm:$0xf]
    %v93 = vld [vmem:[%s2 + $0x30] sm:$0xf]
    %v94 = vld [vmem:[%s2 + $0x34] sm:$0xf]
    %v95 = vld [vmem:[%s2 + $0x38] sm:$0xf]
    %v96 = vld [vmem:[%s2 + $0x3c] sm:$0xf]
    %v113 = vunpack.c.l.b16 %v81
    %v114 = vunpack.c.l.b16 %v82
    %v115 = vunpack.c.l.b16 %v83
    %v116 = vunpack.c.l.b16 %v84
    %v117 = vunpack.c.l.b16 %v85
    %v118 = vunpack.c.l.b16 %v86
    %v119 = vunpack.c.l.b16 %v87
    %v120 = vunpack.c.l.b16 %v88
    %v121 = vunpack.c.l.b16 %v89
    %v122 = vunpack.c.l.b16 %v90
    %v123 = vunpack.c.l.b16 %v91
    %v124 = vunpack.c.l.b16 %v92
    %v125 = vunpack.c.l.b16 %v93
    %v126 = vunpack.c.l.b16 %v94
    %v127 = vunpack.c.l.b16 %v95
    %v128 = vunpack.c.l.b16 %v96
    %v129 = vpack.c.b16 %v114, %v113
    %v130 = vpack.c.b16 %v116, %v115
    %v131 = vpack.c.b16 %v118, %v117
    %v132 = vpack.c.b16 %v120, %v119
    %v133 = vpack.c.b16 %v122, %v121
    %v134 = vpack.c.b16 %v124, %v123
    %v135 = vpack.c.b16 %v126, %v125
    %v136 = vpack.c.b16 %v128, %v127
    %145 = vmatprep.subr.bf16.mxu0 0
    %146 = vmatpush1.bf16.msra.mxu0 %v129
    %147 = vmatprep.subr.bf16.mxu0 0
    %148 = vmatpush1.bf16.msra.mxu0 %v130
    %149 = vmatprep.subr.bf16.mxu0 0
    %150 = vmatpush1.bf16.msra.mxu0 %v131
    %151 = vmatprep.subr.bf16.mxu0 0
    %152 = vmatpush1.bf16.msra.mxu0 %v132
    %153 = vmatprep.subr.bf16.mxu0 0
    %154 = vmatpush1.bf16.msra.mxu0 %v133
    %155 = vmatprep.subr.bf16.mxu0 0
    %156 = vmatpush1.bf16.msra.mxu0 %v134
    %157 = vmatprep.subr.bf16.mxu0 0
    %158 = vmatpush1.bf16.msra.mxu0 %v135
    %159 = vmatprep.subr.bf16.mxu0 0
    %160 = vmatpush1.bf16.msra.mxu0 %v136
    %161 = vmatprep.subr.bf16.mxu0 0
    %162 = vmatpush1.bf16.msra.mxu0 0
    %163 = vmatprep.subr.bf16.mxu0 0
    %164 = vmatpush1.bf16.msra.mxu0 0
    %165 = vmatprep.subr.bf16.mxu0 0
    %166 = vmatpush1.bf16.msra.mxu0 0
    %167 = vmatprep.subr.bf16.mxu0 0
    %168 = vmatpush1.bf16.msra.mxu0 0
    %169 = vmatprep.subr.bf16.mxu0 0
    %170 = vmatpush1.bf16.msra.mxu0 0
    %171 = vmatprep.subr.bf16.mxu0 0
    %172 = vmatpush1.bf16.msra.mxu0 0
    %173 = vmatprep.subr.bf16.mxu0 0
    %174 = vmatpush1.bf16.msra.mxu0 0
    %175 = vmatprep.subr.bf16.mxu0 0
    %176 = vmatpush1.bf16.msra.mxu0 0
    %177 = vmatprep.mubr.bf16.mxu0 0
    %178 = vmatmul.mubr.bf16.gmra.mrb[0].mxu0 %v80
    %v179 = vpop.f32.mrb[0].mxu0
    %v180 = vadd.f32 0.0, %v179
    %v181 = vpop.f32.mrb[0].mxu0
    %v182 = vpop.f32.mrb[0].mxu0
    %v183 = vadd.f32 0.0, %v182
    %v184 = vpop.f32.mrb[0].mxu0
    %185 = vdwg.mxu0
    %v186 = vpack.c.bf16 %v183, %v180
    %v188 = vunpack.c.l.b16 %v186
    %v189 = vunpack.c.h.b16 %v186
    %v190 = vpack.c.b16 %v188, %v188
    %v191 = vpack.c.b16 %v189, %v189
    %vm194 = vcmask 257024
    %195 = vst.msk [vmem:[#allocation2] sm:$0xf] %vm194, %v190
    %196 = vst.msk [vmem:[#allocation2 + $0x4] sm:$0xf] %vm194, %v191
    // Predicated region
    $region14: #{tpu_custom_call.1} parent=1 // pred_check
      _
    $region15: #{tpu_custom_call.1} parent=1 // pred_check_branch
      %198 = sbr.rel (0) target = $region17
    $region16: #{tpu_custom_call.1} parent=1 // pred_region
      %s200 = ssub.s32 128, 128
      %201 = vsyncadd [#allocation3], %s200
      %s202 = sshll.u32 [#allocation2], 4
      %s203 = int_to_ptr.vmem [resolvable:$true] %s202
      %208 = dma.vmem_to_hbm [thread:$0]  %s203, 128, %s3, [#allocation3], 64, 64, 4
    $region17: #{tpu_custom_call.1} parent=1 // pred_fallthru
      _
    // Predicated region
    $region18: #{tpu_custom_call.1} parent=1 // pred_check
      _
    $region19: #{tpu_custom_call.1} parent=1 // pred_check_branch
      %210 = sbr.rel (0) target = $region21
    $region20: #{tpu_custom_call.1} parent=1 // pred_region
      %211 = dma.done [#allocation3], 128
    $region21: #{tpu_custom_call.1} parent=1 // pred_fallthru
      _
    %212 = vsyncpa [#allocation3], 1

</llo_original>
